<compile_context>
chip_gen: v7x
topology: tpu7x:2x2x1
jax: 0.10.0
libtpu: 0.0.40
codegen_flags: <defaults>
</compile_context>

<pallas_src>
import numpy as np

import jax
import jax.numpy as jnp
from jax import lax
from jax.experimental import pallas as pl
from jax.experimental.pallas import tpu as pltpu

SMOOTH = 10.0
EPS = 1e-8
NORM_EPS = 1e-12  # F.normalize default eps
_INV_EPS = float(np.float32(1.0) / np.float32(EPS))  # 1/(0 + eps) in f32


def _choose_tm(n: int) -> int:
    """Row-tile size.

    * n <= 128: single tile (block == full dim, legal for any n).
    * n  > 128: TM is a multiple of 128 (column-slab lane constraint and
      sublane packing for narrow dtypes), capped so that (a) the grid has at
      least 2 steps -> both v7x TensorCores get work, and (b) each (TM, N)
      f32 slab stays <= ~2 MiB.
    """
    if n <= 128:
        return n
    vmem_cap = max(128, (((2 * 1024 * 1024) // (4 * n)) // 128) * 128)
    par_cap = max(128, (pl.cdiv(n, 2) // 128) * 128)   # keep >= 2 grid steps
    return min(512, vmem_cap, par_cap)


def _vmem_limit_bytes():
    """Generation-aware scoped-VMEM limit (None -> compiler default)."""
    try:
        cap = int(pltpu.get_tpu_info().vmem_capacity_bytes)
        return min(96 * 1024 * 1024, (cap * 3) // 4)
    except Exception:
        return None


def _make_kernel(n: int, tm: int):
    needs_mask = (n % tm) != 0

    def kernel(s_row_ref, s_col_ref, lab_tc_ref, lab_fr_ref,
               lab_fc_ref, lab_tr_ref, v2t_out_ref, t2v_out_ref):
        # ----------------- v2t: (TM, N) row slab, lane-axis reductions -------
        s_r = s_row_ref[...].astype(jnp.float32)            # (TM, N)
        lab_tc = lab_tc_ref[...].astype(jnp.float32)        # (TM, 1) tile labels
        lab_fr = lab_fr_ref[...].astype(jnp.float32)        # (1, N)  all labels

        mask_r = jnp.abs(lab_tc - lab_fr) < 0.5              # (TM, N) bool
        l1_r = jnp.sum(mask_r.astype(jnp.float32), axis=-1, keepdims=True)
        inv_l1_r = 1.0 / jnp.maximum(l1_r, NORM_EPS)          # = pred1 on matches
        inv_pos_r = 1.0 / (inv_l1_r + EPS)                    # (TM,1): 1/(pred1+eps)
        # mask is 0/1 -> denominator reciprocal is a per-row 2-way select;
        # no (TM, N) divide ever hits the EUP.
        inv_denom_r = jnp.where(mask_r, inv_pos_r, _INV_EPS)  # (TM, N)

        x_r = SMOOTH * s_r
        m_r = jnp.max(x_r, axis=-1, keepdims=True)
        e_r = jnp.exp(x_r - m_r)
        p_r = e_r * (1.0 / jnp.sum(e_r, axis=-1, keepdims=True))   # v2t_pred
        kl_v2t = jnp.sum(p_r * jnp.log(EPS + p_r * inv_denom_r),
                         axis=-1, keepdims=True)                    # (TM, 1)

        # --------------- t2v: (N, TM) column slab, sublane reductions --------
        s_c = s_col_ref[...].astype(jnp.float32)             # (N, TM)
        lab_fc = lab_fc_ref[...].astype(jnp.float32)         # (N, 1)  all labels
        lab_tr = lab_tr_ref[...].astype(jnp.float32)         # (1, TM) tile labels

        # |labels| mask is symmetric, so this is mask_r^T computed directly
        # in the column orientation (VALU has slack; avoids any transpose).
        mask_c = jnp.abs(lab_fc - lab_tr) < 0.5               # (N, TM)
        l1_c = jnp.sum(mask_c.astype(jnp.float32), axis=0, keepdims=True)
        inv_l1_c = 1.0 / jnp.maximum(l1_c, NORM_EPS)           # (1, TM)
        inv_pos_c = 1.0 / (inv_l1_c + EPS)
        inv_denom_c = jnp.where(mask_c, inv_pos_c, _INV_EPS)   # (N, TM)

        x_c = SMOOTH * s_c
        m_c = jnp.max(x_c, axis=0, keepdims=True)              # (1, TM)
        e_c = jnp.exp(x_c - m_c)
        p_c = e_c * (1.0 / jnp.sum(e_c, axis=0, keepdims=True))    # t2v_pred^T
        kl_t2v = jnp.sum(p_c * jnp.log(EPS + p_c * inv_denom_c),
                         axis=0, keepdims=True)                 # (1, TM)

        if needs_mask:
            # Only compiled for a partial last tile; zero padded-row/lane
            # partials (tiny (TM,1)/(1,TM) selects, not (TM,N)).
            base = pl.program_id(0) * tm
            rid = base + lax.broadcasted_iota(jnp.int32, (tm, 1), 0)
            kl_v2t = jnp.where(rid < n, kl_v2t, 0.0)
            cid = base + lax.broadcasted_iota(jnp.int32, (1, tm), 1)
            kl_t2v = jnp.where(cid < n, kl_t2v, 0.0)

        v2t_out_ref[...] = kl_v2t
        t2v_out_ref[...] = kl_t2v          # lane-dense store

    return kernel


def cmpm_loss(sims: jax.Array, labels: jax.Array) -> jax.Array:
    """Pallas CMPM loss. sims: (N, N) similarity matrix, labels: (N,) ids."""
    n = sims.shape[0]
    assert sims.shape == (n, n)
    tm = _choose_tm(n)
    grid = (pl.cdiv(n, tm),)

    lab = labels.astype(jnp.float32)
    lab_col = lab.reshape(n, 1)
    lab_row = lab.reshape(1, n)

    itemsize = jnp.dtype(sims.dtype).itemsize
    cost = pl.CostEstimate(
        flops=int(28 * n * n),
        transcendentals=int(4 * n * n),          # 2 exp + 2 log over N^2
        bytes_accessed=int(2 * n * n * itemsize + 8 * n * 4),
    )

    cp_kwargs = dict(dimension_semantics=("parallel",))
    vlim = _vmem_limit_bytes()
    if vlim is not None:
        cp_kwargs["vmem_limit_bytes"] = int(vlim)

    kl_v2t_rows, kl_t2v_cols = pl.pallas_call(
        _make_kernel(n, tm),
        out_shape=(jax.ShapeDtypeStruct((n, 1), jnp.float32),
                   jax.ShapeDtypeStruct((1, n), jnp.float32)),
        grid=grid,
        in_specs=[
            pl.BlockSpec((tm, n), lambda i: (i, 0)),   # sims row slab
            pl.BlockSpec((n, tm), lambda i: (0, i)),   # sims column slab (same array)
            pl.BlockSpec((tm, 1), lambda i: (i, 0)),   # tile labels, column view
            pl.BlockSpec((1, n), lambda i: (0, 0)),    # all labels, row view
            pl.BlockSpec((n, 1), lambda i: (0, 0)),    # all labels, column view
            pl.BlockSpec((1, tm), lambda i: (0, i)),   # tile labels, row view
        ],
        out_specs=(pl.BlockSpec((tm, 1), lambda i: (i, 0)),
                   pl.BlockSpec((1, tm), lambda i: (0, i))),
        compiler_params=pltpu.CompilerParams(**cp_kwargs),
        cost_estimate=cost,
    )(sims, sims, lab_col, lab_row, lab_col, lab_row)

    # loss = mean(v2t_kl) + mean(t2v_kl)
    return (jnp.sum(kl_v2t_rows) + jnp.sum(kl_t2v_cols)) / jnp.float32(n)


def _reference_cmpm_loss(sims, labels):
    """Pure-JAX reference mirroring the PyTorch module, for verification."""
    lab = labels.astype(jnp.float32)
    label_mask = (jnp.abs(lab[:, None] - lab[None, :]) < 0.5).astype(jnp.float32)
    row_l1 = jnp.sum(jnp.abs(label_mask), axis=-1, keepdims=True)
    label_mask_norm = label_mask / jnp.maximum(row_l1, NORM_EPS)
    s32 = sims.astype(jnp.float32)
    v2t_pred = jax.nn.softmax(SMOOTH * s32, axis=-1)
    t2v_pred = jax.nn.softmax(SMOOTH * s32.T, axis=-1)

    def kl(pred1, pred2):
        return jnp.sum(pred2 * jnp.log(EPS + pred2 / (pred1 + EPS)), axis=1)

    return kl(label_mask_norm, v2t_pred).mean() + kl(label_mask_norm, t2v_pred).mean()


if __name__ == "__main__":
    key = jax.random.PRNGKey(0)
    k1, k2, k3, k4, k5, k6 = jax.random.split(key, 6)

    # Primary small case (single-tile path, n <= 128).
    n = 8
    sims = jax.random.normal(k1, (n, n), dtype=jnp.float32)
    labels = jax.random.randint(k2, (n,), 0, 4, dtype=jnp.int32)
    loss = jax.block_until_ready(cmpm_loss(sims, labels))
    ref = jax.block_until_ready(_reference_cmpm_loss(sims, labels))
    assert jnp.isfinite(loss), "loss is not finite"
    assert jnp.allclose(loss, ref, rtol=1e-5, atol=1e-5), (loss, ref)

    # Multi-tile path (TM=128, grid=3, column-slab + sublane reductions).
    n2 = 384
    sims2 = jax.random.normal(k3, (n2, n2), dtype=jnp.float32)
    labels2 = jax.random.randint(k4, (n2,), 0, 16, dtype=jnp.int32)
    loss2 = jax.block_until_ready(cmpm_loss(sims2, labels2))
    ref2 = jax.block_until_ready(_reference_cmpm_loss(sims2, labels2))
    assert jnp.isfinite(loss2), "tiled loss is not finite"
    assert jnp.allclose(loss2, ref2, rtol=1e-4, atol=1e-4), (loss2, ref2)

    # Irregular size (TM=128, grid=2 with a partial, masked last tile).
    n3 = 200
    sims3 = jax.random.normal(k5, (n3, n3), dtype=jnp.float32)
    labels3 = jax.random.randint(k6, (n3,), 0, 10, dtype=jnp.int32)
    loss3 = jax.block_until_ready(cmpm_loss(sims3, labels3))
    ref3 = jax.block_until_ready(_reference_cmpm_loss(sims3, labels3))
    assert jnp.isfinite(loss3), "partial-tile loss is not finite"
    assert jnp.allclose(loss3, ref3, rtol=1e-4, atol=1e-4), (loss3, ref3)

    print("KERNEL_OK")
</pallas_src>

<mosaic_0001>
module attributes {stable_mosaic.version = 11 : i64} {
  func.func @kernel(%arg0: i32, %arg1: memref<8x8xf32, #tpu.memory_space<vmem>>, %arg2: memref<8x8xf32, #tpu.memory_space<vmem>>, %arg3: memref<8x1xf32, #tpu.memory_space<vmem>>, %arg4: memref<1x8xf32, #tpu.memory_space<vmem>>, %arg5: memref<8x1xf32, #tpu.memory_space<vmem>>, %arg6: memref<1x8xf32, #tpu.memory_space<vmem>>, %arg7: memref<8x1xf32, #tpu.memory_space<vmem>>, %arg8: memref<1x8xf32, #tpu.memory_space<vmem>>) attributes {dimension_semantics = [#tpu.dimension_semantics<parallel>], iteration_bounds = array<i64: 1>, scalar_prefetch = 0 : i64, scratch_operands = 0 : i64, tpu.core_type = #tpu.core_type<tc>, window_params = [{transform_indices = @transform_0, window_bounds = array<i64: 8, 8>}, {transform_indices = @transform_1, window_bounds = array<i64: 8, 8>}, {transform_indices = @transform_2, window_bounds = array<i64: 8, 1>}, {pipeline_mode = #tpu.pipeline_mode<synchronous>, transform_indices = @transform_3, window_bounds = array<i64: 1, 8>}, {pipeline_mode = #tpu.pipeline_mode<synchronous>, transform_indices = @transform_4, window_bounds = array<i64: 8, 1>}, {transform_indices = @transform_5, window_bounds = array<i64: 1, 8>}, {transform_indices = @transform_6, window_bounds = array<i64: 8, 1>}, {transform_indices = @transform_7, window_bounds = array<i64: 1, 8>}]} {
    %c0 = arith.constant 0 : index
    %c0_0 = arith.constant 0 : index
    %0 = vector.load %arg1[%c0, %c0_0] : memref<8x8xf32, #tpu.memory_space<vmem>>, vector<8x8xf32>
    %c0_1 = arith.constant 0 : index
    %c0_2 = arith.constant 0 : index
    %1 = vector.load %arg3[%c0_1, %c0_2] : memref<8x1xf32, #tpu.memory_space<vmem>>, vector<8x1xf32>
    %c0_3 = arith.constant 0 : index
    %c0_4 = arith.constant 0 : index
    %2 = vector.load %arg4[%c0_3, %c0_4] : memref<1x8xf32, #tpu.memory_space<vmem>>, vector<1x8xf32>
    %3 = vector.broadcast %1 : vector<8x1xf32> to vector<8x8xf32>
    %4 = vector.broadcast %2 : vector<1x8xf32> to vector<8x8xf32>
    %5 = arith.subf %3, %4 : vector<8x8xf32>
    %6 = math.absf %5 : vector<8x8xf32>
    %cst = arith.constant 5.000000e-01 : f32
    %7 = vector.broadcast %cst : f32 to vector<8x8xf32>
    %8 = arith.cmpf olt, %6, %7 : vector<8x8xf32>
    %9 = arith.extui %8 : vector<8x8xi1> to vector<8x8xi32>
    %10 = arith.sitofp %9 : vector<8x8xi32> to vector<8x8xf32>
    %cst_5 = arith.constant dense<0.000000e+00> : vector<8xf32>
    %11 = vector.multi_reduction <add>, %10, %cst_5 [1] : vector<8x8xf32> to vector<8xf32>
    %12 = vector.shape_cast %11 : vector<8xf32> to vector<8x1xf32>
    %cst_6 = arith.constant 9.99999996E-13 : f32
    %13 = vector.broadcast %cst_6 : f32 to vector<8x1xf32>
    %14 = arith.maximumf %12, %13 : vector<8x1xf32>
    %cst_7 = arith.constant 1.000000e+00 : f32
    %15 = vector.broadcast %cst_7 : f32 to vector<8x1xf32>
    %16 = arith.divf %15, %14 : vector<8x1xf32>
    %cst_8 = arith.constant 9.99999993E-9 : f32
    %17 = vector.broadcast %cst_8 : f32 to vector<8x1xf32>
    %18 = arith.addf %16, %17 : vector<8x1xf32>
    %cst_9 = arith.constant 1.000000e+00 : f32
    %19 = vector.broadcast %cst_9 : f32 to vector<8x1xf32>
    %20 = arith.divf %19, %18 : vector<8x1xf32>
    %cst_10 = arith.constant 1.000000e+08 : f32
    %21 = vector.shape_cast %20 : vector<8x1xf32> to vector<8x1xf32>
    %22 = vector.broadcast %21 : vector<8x1xf32> to vector<8x8xf32>
    %23 = vector.broadcast %cst_10 : f32 to vector<8x8xf32>
    %24 = arith.select %8, %22, %23 : vector<8x8xi1>, vector<8x8xf32>
    %cst_11 = arith.constant 1.000000e+01 : f32
    %25 = vector.broadcast %cst_11 : f32 to vector<8x8xf32>
    %26 = arith.mulf %25, %0 : vector<8x8xf32>
    %cst_12 = arith.constant dense<0xFF800000> : vector<8xf32>
    %27 = vector.multi_reduction <maximumf>, %26, %cst_12 [1] : vector<8x8xf32> to vector<8xf32>
    %28 = vector.shape_cast %27 : vector<8xf32> to vector<8x1xf32>
    %29 = vector.broadcast %28 : vector<8x1xf32> to vector<8x8xf32>
    %30 = arith.subf %26, %29 : vector<8x8xf32>
    %31 = math.exp %30 : vector<8x8xf32>
    %cst_13 = arith.constant dense<0.000000e+00> : vector<8xf32>
    %32 = vector.multi_reduction <add>, %31, %cst_13 [1] : vector<8x8xf32> to vector<8xf32>
    %33 = vector.shape_cast %32 : vector<8xf32> to vector<8x1xf32>
    %cst_14 = arith.constant 1.000000e+00 : f32
    %34 = vector.broadcast %cst_14 : f32 to vector<8x1xf32>
    %35 = arith.divf %34, %33 : vector<8x1xf32>
    %36 = vector.broadcast %35 : vector<8x1xf32> to vector<8x8xf32>
    %37 = arith.mulf %31, %36 : vector<8x8xf32>
    %38 = arith.mulf %37, %24 : vector<8x8xf32>
    %cst_15 = arith.constant 9.99999993E-9 : f32
    %39 = vector.broadcast %cst_15 : f32 to vector<8x8xf32>
    %40 = arith.addf %39, %38 : vector<8x8xf32>
    %41 = math.log %40 : vector<8x8xf32>
    %42 = arith.mulf %37, %41 : vector<8x8xf32>
    %cst_16 = arith.constant dense<0.000000e+00> : vector<8xf32>
    %43 = vector.multi_reduction <add>, %42, %cst_16 [1] : vector<8x8xf32> to vector<8xf32>
    %44 = vector.shape_cast %43 : vector<8xf32> to vector<8x1xf32>
    %c0_17 = arith.constant 0 : index
    %c0_18 = arith.constant 0 : index
    %45 = vector.load %arg2[%c0_17, %c0_18] : memref<8x8xf32, #tpu.memory_space<vmem>>, vector<8x8xf32>
    %c0_19 = arith.constant 0 : index
    %c0_20 = arith.constant 0 : index
    %46 = vector.load %arg5[%c0_19, %c0_20] : memref<8x1xf32, #tpu.memory_space<vmem>>, vector<8x1xf32>
    %c0_21 = arith.constant 0 : index
    %c0_22 = arith.constant 0 : index
    %47 = vector.load %arg6[%c0_21, %c0_22] : memref<1x8xf32, #tpu.memory_space<vmem>>, vector<1x8xf32>
    %48 = vector.broadcast %46 : vector<8x1xf32> to vector<8x8xf32>
    %49 = vector.broadcast %47 : vector<1x8xf32> to vector<8x8xf32>
    %50 = arith.subf %48, %49 : vector<8x8xf32>
    %51 = math.absf %50 : vector<8x8xf32>
    %cst_23 = arith.constant 5.000000e-01 : f32
    %52 = vector.broadcast %cst_23 : f32 to vector<8x8xf32>
    %53 = arith.cmpf olt, %51, %52 : vector<8x8xf32>
    %54 = arith.extui %53 : vector<8x8xi1> to vector<8x8xi32>
    %55 = arith.sitofp %54 : vector<8x8xi32> to vector<8x8xf32>
    %cst_24 = arith.constant dense<0.000000e+00> : vector<8xf32>
    %56 = vector.multi_reduction <add>, %55, %cst_24 [0] : vector<8x8xf32> to vector<8xf32>
    %57 = vector.shape_cast %56 : vector<8xf32> to vector<1x8xf32>
    %cst_25 = arith.constant 9.99999996E-13 : f32
    %58 = vector.broadcast %cst_25 : f32 to vector<1x8xf32>
    %59 = arith.maximumf %57, %58 : vector<1x8xf32>
    %cst_26 = arith.constant 1.000000e+00 : f32
    %60 = vector.broadcast %cst_26 : f32 to vector<1x8xf32>
    %61 = arith.divf %60, %59 : vector<1x8xf32>
    %cst_27 = arith.constant 9.99999993E-9 : f32
    %62 = vector.broadcast %cst_27 : f32 to vector<1x8xf32>
    %63 = arith.addf %61, %62 : vector<1x8xf32>
    %cst_28 = arith.constant 1.000000e+00 : f32
    %64 = vector.broadcast %cst_28 : f32 to vector<1x8xf32>
    %65 = arith.divf %64, %63 : vector<1x8xf32>
    %cst_29 = arith.constant 1.000000e+08 : f32
    %66 = vector.shape_cast %65 : vector<1x8xf32> to vector<1x8xf32>
    %67 = vector.broadcast %66 : vector<1x8xf32> to vector<8x8xf32>
    %68 = vector.broadcast %cst_29 : f32 to vector<8x8xf32>
    %69 = arith.select %53, %67, %68 : vector<8x8xi1>, vector<8x8xf32>
    %cst_30 = arith.constant 1.000000e+01 : f32
    %70 = vector.broadcast %cst_30 : f32 to vector<8x8xf32>
    %71 = arith.mulf %70, %45 : vector<8x8xf32>
    %cst_31 = arith.constant dense<0xFF800000> : vector<8xf32>
    %72 = vector.multi_reduction <maximumf>, %71, %cst_31 [0] : vector<8x8xf32> to vector<8xf32>
    %73 = vector.shape_cast %72 : vector<8xf32> to vector<1x8xf32>
    %74 = vector.broadcast %73 : vector<1x8xf32> to vector<8x8xf32>
    %75 = arith.subf %71, %74 : vector<8x8xf32>
    %76 = math.exp %75 : vector<8x8xf32>
    %cst_32 = arith.constant dense<0.000000e+00> : vector<8xf32>
    %77 = vector.multi_reduction <add>, %76, %cst_32 [0] : vector<8x8xf32> to vector<8xf32>
    %78 = vector.shape_cast %77 : vector<8xf32> to vector<1x8xf32>
    %cst_33 = arith.constant 1.000000e+00 : f32
    %79 = vector.broadcast %cst_33 : f32 to vector<1x8xf32>
    %80 = arith.divf %79, %78 : vector<1x8xf32>
    %81 = vector.broadcast %80 : vector<1x8xf32> to vector<8x8xf32>
    %82 = arith.mulf %76, %81 : vector<8x8xf32>
    %83 = arith.mulf %82, %69 : vector<8x8xf32>
    %cst_34 = arith.constant 9.99999993E-9 : f32
    %84 = vector.broadcast %cst_34 : f32 to vector<8x8xf32>
    %85 = arith.addf %84, %83 : vector<8x8xf32>
    %86 = math.log %85 : vector<8x8xf32>
    %87 = arith.mulf %82, %86 : vector<8x8xf32>
    %cst_35 = arith.constant dense<0.000000e+00> : vector<8xf32>
    %88 = vector.multi_reduction <add>, %87, %cst_35 [0] : vector<8x8xf32> to vector<8xf32>
    %89 = vector.shape_cast %88 : vector<8xf32> to vector<1x8xf32>
    %c0_36 = arith.constant 0 : index
    %c0_37 = arith.constant 0 : index
    %90 = vector.load %arg7[%c0_36, %c0_37] : memref<8x1xf32, #tpu.memory_space<vmem>>, vector<8x1xf32>
    tpu.vector_store %arg7[%c0_36, %c0_37], %44 {strides = array<i32>} : memref<8x1xf32, #tpu.memory_space<vmem>>, vector<8x1xf32>,
    %c0_38 = arith.constant 0 : index
    %c0_39 = arith.constant 0 : index
    %91 = vector.load %arg8[%c0_38, %c0_39] : memref<1x8xf32, #tpu.memory_space<vmem>>, vector<1x8xf32>
    tpu.vector_store %arg8[%c0_38, %c0_39], %89 {strides = array<i32>} : memref<1x8xf32, #tpu.memory_space<vmem>>, vector<1x8xf32>,
    return
  }
  func.func @transform_0(%arg0: i32) -> (i32, i32) {
    %c0_i32 = arith.constant 0 : i32
    %c0_i32_0 = arith.constant 0 : i32
    return %arg0, %c0_i32 : i32, i32
  }
  func.func @transform_1(%arg0: i32) -> (i32, i32) {
    %c0_i32 = arith.constant 0 : i32
    %c0_i32_0 = arith.constant 0 : i32
    return %c0_i32, %arg0 : i32, i32
  }
  func.func @transform_2(%arg0: i32) -> (i32, i32) {
    %c0_i32 = arith.constant 0 : i32
    %c0_i32_0 = arith.constant 0 : i32
    return %arg0, %c0_i32 : i32, i32
  }
  func.func @transform_3(%arg0: i32) -> (i32, i32) {
    %c0_i32 = arith.constant 0 : i32
    %c0_i32_0 = arith.constant 0 : i32
    %c0_i32_1 = arith.constant 0 : i32
    return %c0_i32, %c0_i32_0 : i32, i32
  }
  func.func @transform_4(%arg0: i32) -> (i32, i32) {
    %c0_i32 = arith.constant 0 : i32
    %c0_i32_0 = arith.constant 0 : i32
    %c0_i32_1 = arith.constant 0 : i32
    return %c0_i32, %c0_i32_0 : i32, i32
  }
  func.func @transform_5(%arg0: i32) -> (i32, i32) {
    %c0_i32 = arith.constant 0 : i32
    %c0_i32_0 = arith.constant 0 : i32
    return %c0_i32, %arg0 : i32, i32
  }
  func.func @transform_6(%arg0: i32) -> (i32, i32) {
    %c0_i32 = arith.constant 0 : i32
    %c0_i32_0 = arith.constant 0 : i32
    return %arg0, %c0_i32 : i32, i32
  }
  func.func @transform_7(%arg0: i32) -> (i32, i32) {
    %c0_i32 = arith.constant 0 : i32
    %c0_i32_0 = arith.constant 0 : i32
    return %c0_i32, %arg0 : i32, i32
  }
}

</mosaic_0001>

<llo_original>
// kernel: tpu_custom_call.1
$region0: #{tpu_custom_call.1}
  #allocation0 [shape = 'u32[]', space=smem, size = 0x4, offset = 0x4, fixed_abs, tag = 'smem constant byte address 0x4 - core index']
  #allocation1 [shape = 'u32[144,128]{1,0:T(1,128)}', space=vmem, size = 0x12000, scoped, tag = 'internal scratch']
  %s0 = inlined_call_operand.vmem [shape: f32[8,8], index: 0, kind: input, shape index: {}]
  %s1 = inlined_call_operand.vmem [shape: f32[8,8], index: 1, kind: input, shape index: {}]
  %s2 = inlined_call_operand.vmem [shape: f32[8,1], index: 2, kind: input, shape index: {}]
  %s3 = inlined_call_operand.vmem [shape: f32[1,8], index: 3, kind: input, shape index: {}]
  %s4 = inlined_call_operand.vmem [shape: f32[8,1], index: 4, kind: input, shape index: {}]
  %s5 = inlined_call_operand.vmem [shape: f32[1,8], index: 5, kind: input, shape index: {}]
  %s6 = inlined_call_operand.vmem [shape: f32[8,1], index: 6, kind: output, shape index: {0}]
  %s7 = inlined_call_operand.hbm [shape: f32[1,8], index: 7, kind: output, shape index: {1}]
  %8 = xla_tuple %s6, %s7
  %s9 = sld [smem:[#allocation0]]
  $region42: #{tpu_custom_call.1} parent=0
    _
  %s11 = ssub.s32 1, %s9
  %s12 = scalar_select 0, %s11, %s9
  $region1: #{tpu_custom_call.1} parent=0
    #allocation2 [shape = 'u8[512]{0}', space=vmem, size = 0x400, scoped, tag = 'output window, operand 1, single buffered']
    #allocation3 [shape = 's32[1]{0}', space=sflag, size = 0x4, scoped, tag = 'scoped memory for tpu_custom_call.1']
    %13 = vsyncpa [#allocation3], 0
    // Predicated region
    $region2: #{tpu_custom_call.1} parent=1 // pred_check
      _
    $region3: #{tpu_custom_call.1} parent=1 // pred_check_branch
      %15 = sbr.rel (0) target = $region5
    $region4: #{tpu_custom_call.1} parent=1 // pred_region
      _
    $region5: #{tpu_custom_call.1} parent=1 // pred_fallthru
      _
    // Predicated region
    $region6: #{tpu_custom_call.1} parent=1 // pred_check
      _
    $region7: #{tpu_custom_call.1} parent=1 // pred_check_branch
      %17 = sbr.rel (0) target = $region9
    $region8: #{tpu_custom_call.1} parent=1 // pred_region
      _
    $region9: #{tpu_custom_call.1} parent=1 // pred_fallthru
      _
    // Predicated region
    $region10: #{tpu_custom_call.1} parent=1 // pred_check
      _
    $region11: #{tpu_custom_call.1} parent=1 // pred_check_branch
      %19 = sbr.rel (0) target = $region13
    $region12: #{tpu_custom_call.1} parent=1 // pred_region
      _
    $region13: #{tpu_custom_call.1} parent=1 // pred_fallthru
      _
    // Predicated region
    $region14: #{tpu_custom_call.1} parent=1 // pred_check
      _
    $region15: #{tpu_custom_call.1} parent=1 // pred_check_branch
      %21 = sbr.rel (0) target = $region17
    $region16: #{tpu_custom_call.1} parent=1 // pred_region
      _
    $region17: #{tpu_custom_call.1} parent=1 // pred_fallthru
      _
    // Predicated region
    $region18: #{tpu_custom_call.1} parent=1 // pred_check
      _
    $region19: #{tpu_custom_call.1} parent=1 // pred_check_branch
      %23 = sbr.rel (0) target = $region21
    $region20: #{tpu_custom_call.1} parent=1 // pred_region
      _
    $region21: #{tpu_custom_call.1} parent=1 // pred_fallthru
      _
    // Predicated region
    $region22: #{tpu_custom_call.1} parent=1 // pred_check
      _
    $region23: #{tpu_custom_call.1} parent=1 // pred_check_branch
      %25 = sbr.rel (0) target = $region25
    $region24: #{tpu_custom_call.1} parent=1 // pred_region
      _
    $region25: #{tpu_custom_call.1} parent=1 // pred_fallthru
      _
    %v26 = vld [vmem:[%s0] sm:$0xff]
    %v27 = vld [vmem:[%s2] sm:$0xff]
    %v28 = vld [vmem:[%s3] sm:$0x1]
    %30 = vset.pattern.permute.xlu0 0
    %31 = vperm.xlu0 %30, %v27
    %v32 = vpop.permute.xlu0 %31
    %v35 = vlaneseq
    %v36 = vshrl.u32 %v35, 7
    %v37 = vsub.s32 0, %v36
    %v38 = vrot.slane %v28, %v37
    %v40 = vsub.f32 %v32, %v38
    %v41 = vand.u32 2147483647, %v40
    %vm42 = vcmp.lt.f32.partialorder %v41, 0.5
    %v43 = vsel %vm42, 1, 0
    %v44 = vcvt.s32.f32 %v43
    %vm45 = vcmask 64512
    %v46 = vsel %vm45, %v44, 0.0
    %47 = vadd.xlane.f32.xlu0 %v46
    %v48 = vpop.xlane.xlu0 %47
    %v49 = vmax.f32 %v48, 1e-12
    %v50 = vrcp.pop %v49
    %v51 = vmul.f32 1.0, %v50
    %v52 = vadd.f32 %v51, 1e-08
    %v53 = vrcp.pop %v52
    %v54 = vmul.f32 1.0, %v53
    %v55 = vsel %vm42, %v54, 1e+08
    %v56 = vmul.f32 %v26, 10.0
    %v57 = vsel %vm45, %v56, -inf
    %58 = vmax.xlane.f32.xlu0 %v57
    %v59 = vpop.xlane.xlu0 %58
    %v60 = vsub.f32 %v56, %v59
    %v61 = vmul.f32 %v60, 1.442695
    %v62 = vpow.pop %v61
    %v63 = vsel %vm45, %v62, 0.0
    %64 = vadd.xlane.f32.xlu0 %v63
    %v65 = vpop.xlane.xlu0 %64
    %v66 = vrcp.pop %v65
    %v67 = vmul.f32 1.0, %v66
    %v68 = vmul.f32 %v62, %v67
    %v69 = vmul.f32 %v68, %v55
    %v70 = vadd.f32 %v69, 1e-08
    %v71 = vlog2.pop %v70
    %v72 = vmul.f32 %v71, 0.6931472
    %v73 = vmul.f32 %v68, %v72
    %v74 = vsel %vm45, %v73, 0.0
    %75 = vadd.xlane.f32.xlu0 %v74
    %v76 = vpop.xlane.xlu0 %75
    %v77 = vld [vmem:[%s1] sm:$0xff]
    %v78 = vld [vmem:[%s4] sm:$0xff]
    %v79 = vld [vmem:[%s5] sm:$0x1]
    %81 = vset.pattern.permute.xlu0 0
    %82 = vperm.xlu0 %81, %v78
    %v83 = vpop.permute.xlu0 %82
    %v86 = vlaneseq
    %v87 = vshrl.u32 %v86, 7
    %v88 = vsub.s32 0, %v87
    %v89 = vrot.slane %v79, %v88
    %v91 = vsub.f32 %v83, %v89
    %v92 = vand.u32 2147483647, %v91
    %vm93 = vcmp.lt.f32.partialorder %v92, 0.5
    %v94 = vsel %vm93, 1, 0
    %v95 = vcvt.s32.f32 %v94
    %v96 = vsel %vm45, %v95, 0.0
    %v97 = vrot.slane %v96, 4
    %v98 = vadd.f32 %v96, %v97
    %v99 = vrot.slane %v98, 2
    %v100 = vadd.f32 %v98, %v99
    %v101 = vrot.slane %v100, 1
    %v102 = vadd.f32 %v100, %v101
    %v103 = vmax.f32 %v102, 1e-12
    %v104 = vrcp.pop %v103
    %v105 = vmul.f32 1.0, %v104
    %v106 = vadd.f32 %v105, 1e-08
    %v107 = vrcp.pop %v106
    %v108 = vmul.f32 1.0, %v107
    %v109 = vsel %vm93, %v108, 1e+08
    %v110 = vmul.f32 %v77, 10.0
    %v111 = vsel %vm45, %v110, -inf
    %v112 = vrot.slane %v111, 4
    %v113 = vmax.f32 %v111, %v112
    %v114 = vrot.slane %v113, 2
    %v115 = vmax.f32 %v113, %v114
    %v116 = vrot.slane %v115, 1
    %v117 = vmax.f32 %v115, %v116
    %v118 = vsub.f32 %v110, %v117
    %v119 = vmul.f32 %v118, 1.442695
    %v120 = vpow.pop %v119
    %v121 = vsel %vm45, %v120, 0.0
    %v122 = vrot.slane %v121, 4
    %v123 = vadd.f32 %v121, %v122
    %v124 = vrot.slane %v123, 2
    %v125 = vadd.f32 %v123, %v124
    %v126 = vrot.slane %v125, 1
    %v127 = vadd.f32 %v125, %v126
    %v128 = vrcp.pop %v127
    %v129 = vmul.f32 1.0, %v128
    %v130 = vmul.f32 %v120, %v129
    %v131 = vmul.f32 %v130, %v109
    %v132 = vadd.f32 %v131, 1e-08
    %v133 = vlog2.pop %v132
    %v134 = vmul.f32 %v133, 0.6931472
    %v135 = vmul.f32 %v130, %v134
    %v136 = vsel %vm45, %v135, 0.0
    %v137 = vrot.slane %v136, 4
    %v138 = vadd.f32 %v136, %v137
    %v139 = vrot.slane %v138, 2
    %v140 = vadd.f32 %v138, %v139
    %v141 = vrot.slane %v140, 1
    %v142 = vadd.f32 %v140, %v141
    %vm143 = vcmask 7168
    %144 = vst.msk [vmem:[%s6] sm:$0xff] %vm143, %v76
    %vm145 = vcmask 57344
    %146 = vst.msk [vmem:[#allocation2] sm:$0x1] %vm145, %v142
    // Predicated region
    $region26: #{tpu_custom_call.1} parent=1 // pred_check
      _
    $region27: #{tpu_custom_call.1} parent=1 // pred_check_branch
      %148 = sbr.rel (0) target = $region29
    $region28: #{tpu_custom_call.1} parent=1 // pred_region
      _
    $region29: #{tpu_custom_call.1} parent=1 // pred_fallthru
      _
    // Predicated region
    $region30: #{tpu_custom_call.1} parent=1 // pred_check
      _
    $region31: #{tpu_custom_call.1} parent=1 // pred_check_branch
      %150 = sbr.rel (0) target = $region33
    $region32: #{tpu_custom_call.1} parent=1 // pred_region
      %s152 = ssub.s32 16, 16
      %153 = vsyncadd [#allocation3], %s152
      %s155 = sshll.u32 [#allocation2], 4
      %s156 = int_to_ptr.vmem [resolvable:$true] %s155
      %158 = dma.vmem_to_hbm [thread:$0]  %s156, 16, %s7, [#allocation3]
    $region33: #{tpu_custom_call.1} parent=1 // pred_fallthru
      _
    // Predicated region
    $region34: #{tpu_custom_call.1} parent=1 // pred_check
      _
    $region35: #{tpu_custom_call.1} parent=1 // pred_check_branch
      %160 = sbr.rel (0) target = $region37
    $region36: #{tpu_custom_call.1} parent=1 // pred_region
      _
    $region37: #{tpu_custom_call.1} parent=1 // pred_fallthru
      _
    // Predicated region
    $region38: #{tpu_custom_call.1} parent=1 // pred_check
      _
    $region39: #{tpu_custom_call.1} parent=1 // pred_check_branch
      %162 = sbr.rel (0) target = $region41
    $region40: #{tpu_custom_call.1} parent=1 // pred_region
      %163 = dma.done [#allocation3], 16
    $region41: #{tpu_custom_call.1} parent=1 // pred_fallthru
      _
    %164 = vsyncpa [#allocation3], 1

</llo_original>
